<compile_context>
chip_gen: v7x
topology: tpu7x:2x2x1
jax: 0.10.0
libtpu: 0.0.40
codegen_flags: <defaults>
</compile_context>

<pallas_src>
import functools

import jax
import jax.numpy as jnp
from jax.experimental import pallas as pl
from jax.experimental.pallas import tpu as pltpu

INPUT_SIZE = 3
HIDDEN_SIZE = 64
OUTPUT_SIZE = 8  # stand-in for len(target_encoder.classes_)


def _mlp_kernel(xt_ref, w1_ref, b1_ref, w2_ref, b2_ref, ot_ref):
    # xt_ref: (in_dim, TB)   w1_ref: (hidden, in_dim)   b1_ref: (hidden, 1)
    # w2_ref: (out, hidden)  b2_ref: (out, 1)           ot_ref: (out, TB)

    # fc1 on the MXU (K = in_dim = 3); bias + ReLU fused on the VPU.
    h = jnp.dot(w1_ref[...], xt_ref[...], preferred_element_type=jnp.float32)
    h = jnp.maximum(h + b1_ref[...], 0.0)          # (hidden, TB)

    # fc2 on the MXU: (out, hidden) @ (hidden, TB) -> (out, TB)
    y = jnp.dot(w2_ref[...], h, preferred_element_type=jnp.float32)
    ot_ref[...] = (y + b2_ref[...]).astype(ot_ref.dtype)


def _round_up(n, m):
    return ((n + m - 1) // m) * m


@functools.partial(jax.jit, static_argnames=("block_b", "min_blocks"))
def crime_model_forward_t(xt, w1, b1, w2, b2, *, block_b=32768, min_blocks=2):
    """Preferred (transposed-layout) entry point.

    xt: (in_dim, B); w1: (hidden, in_dim); b1: (hidden, 1);
    w2: (out, hidden); b2: (out, 1).  Returns yt: (out, B) float32.
    No wrapper-side transposes: every kernel load/store is lane-dense.
    """
    in_dim, B = xt.shape
    hidden = w1.shape[0]
    out_dim = w2.shape[0]

    block_b = max(128, (block_b // 128) * 128)

    # Pick the number of grid steps FIRST, then size the block, so at most
    # <128 padded columns per block are wasted.  Force >= min_blocks steps
    # when the batch allows so v7x's two TensorCores both get work on the
    # "parallel" grid axis (no effect on v5e/v6e: grid is just a loop there).
    n_blocks = max(1, pl.cdiv(B, block_b))
    if B > 128:
        n_blocks = max(n_blocks, min_blocks)
    blk = _round_up(pl.cdiv(B, n_blocks), 128)
    n_blocks = pl.cdiv(B, blk)
    Bp = n_blocks * blk

    if Bp != B:
        xt = jnp.pad(xt, ((0, 0), (0, Bp - B)))    # ragged batch -> zero pad

    # VMEM/step ~ 2 * (pad8(in_dim) + out_dim) * blk * 4 B = 128*blk bytes
    # double-buffered -> ~4 MiB at blk=32768; well under the 32 MiB limit on
    # every generation (v7x included).
    yt = pl.pallas_call(
        _mlp_kernel,
        out_shape=jax.ShapeDtypeStruct((out_dim, Bp), jnp.float32),
        grid_spec=pltpu.PrefetchScalarGridSpec(
            num_scalar_prefetch=0,
            grid=(n_blocks,),
            in_specs=[
                # activations: tiled along the (lane) batch axis
                pl.BlockSpec((in_dim, blk), lambda i: (0, i)),
                # parameters: resident across all grid steps
                pl.BlockSpec((hidden, in_dim), lambda i: (0, 0)),
                pl.BlockSpec((hidden, 1), lambda i: (0, 0)),
                pl.BlockSpec((out_dim, hidden), lambda i: (0, 0)),
                pl.BlockSpec((out_dim, 1), lambda i: (0, 0)),
            ],
            out_specs=pl.BlockSpec((out_dim, blk), lambda i: (0, i)),
        ),
        compiler_params=pltpu.CompilerParams(
            dimension_semantics=("parallel",),     # batch columns independent
            vmem_limit_bytes=32 * 1024 * 1024,     # safe on v5e/v6e/v7x
        ),
    )(xt, w1, b1, w2, b2)

    return yt[:, :B]                               # drop lane padding


@functools.partial(jax.jit, static_argnames=("block_b",))
def crime_model_forward(x, w1, b1, w2, b2, *, block_b=32768):
    """PyTorch-layout compatibility wrapper: x (B, in_dim) -> (B, out).

    Prefer crime_model_forward_t (feature, batch) to avoid the two boundary
    transposes, which are separate XLA HBM passes.
    """
    yt = crime_model_forward_t(x.T, w1, b1, w2, b2, block_b=block_b)
    return yt.T


def init_params(key, input_size, hidden_size, output_size):
    """Deterministic init mimicking nn.Linear's U(-1/sqrt(fan_in), +1/sqrt(fan_in)),
    stored in PyTorch orientation: W1 (hidden, in), W2 (out, hidden)."""
    k1, k2, k3, k4 = jax.random.split(key, 4)
    bound1 = 1.0 / jnp.sqrt(float(input_size))
    bound2 = 1.0 / jnp.sqrt(float(hidden_size))
    w1 = jax.random.uniform(k1, (hidden_size, input_size), jnp.float32,
                            minval=-bound1, maxval=bound1)
    b1 = jax.random.uniform(k2, (hidden_size, 1), jnp.float32,
                            minval=-bound1, maxval=bound1)
    w2 = jax.random.uniform(k3, (output_size, hidden_size), jnp.float32,
                            minval=-bound2, maxval=bound2)
    b2 = jax.random.uniform(k4, (output_size, 1), jnp.float32,
                            minval=-bound2, maxval=bound2)
    return w1, b1, w2, b2


if __name__ == "__main__":
    key = jax.random.PRNGKey(0)
    kx, kp = jax.random.split(key)

    # Ragged batch on purpose (not a multiple of 128) to exercise the tighter
    # padding rule; B=300 > 128 so the grid gets 2 steps (megacore path).
    batch = 300
    x = jax.random.normal(kx, (batch, INPUT_SIZE), jnp.float32)
    w1, b1, w2, b2 = init_params(kp, INPUT_SIZE, HIDDEN_SIZE, OUTPUT_SIZE)

    # Preferred transposed-layout API: caller supplies (in, B), gets (out, B).
    xt = x.T
    yt = crime_model_forward_t(xt, w1, b1, w2, b2)
    yt = jax.block_until_ready(yt)

    # Compatibility (PyTorch-layout) API.
    out = crime_model_forward(x, w1, b1, w2, b2)
    out = jax.block_until_ready(out)

    # Pure-JAX reference of the PyTorch math: relu(x @ W1.T + b1) @ W2.T + b2
    ref = jnp.maximum(x @ w1.T + b1.T, 0.0) @ w2.T + b2.T

    assert yt.shape == (OUTPUT_SIZE, batch)
    assert out.shape == (batch, OUTPUT_SIZE)
    assert jnp.allclose(yt.T, ref, atol=1e-5, rtol=1e-5)
    assert jnp.allclose(out, ref, atol=1e-5, rtol=1e-5)

    print("KERNEL_OK")
</pallas_src>

<mosaic_0001>
module attributes {stable_mosaic.version = 11 : i64} {
  func.func @_mlp_kernel(%arg0: i32, %arg1: memref<3x256xf32, #tpu.memory_space<vmem>>, %arg2: memref<64x3xf32, #tpu.memory_space<vmem>>, %arg3: memref<64x1xf32, #tpu.memory_space<vmem>>, %arg4: memref<8x64xf32, #tpu.memory_space<vmem>>, %arg5: memref<8x1xf32, #tpu.memory_space<vmem>>, %arg6: memref<8x256xf32, #tpu.memory_space<vmem>>) attributes {dimension_semantics = [#tpu.dimension_semantics<parallel>], iteration_bounds = array<i64: 2>, scalar_prefetch = 0 : i64, scratch_operands = 0 : i64, tpu.core_type = #tpu.core_type<tc>, window_params = [{transform_indices = @transform_0, window_bounds = array<i64: 3, 256>}, {pipeline_mode = #tpu.pipeline_mode<synchronous>, transform_indices = @transform_1, window_bounds = array<i64: 64, 3>}, {pipeline_mode = #tpu.pipeline_mode<synchronous>, transform_indices = @transform_2, window_bounds = array<i64: 64, 1>}, {pipeline_mode = #tpu.pipeline_mode<synchronous>, transform_indices = @transform_3, window_bounds = array<i64: 8, 64>}, {pipeline_mode = #tpu.pipeline_mode<synchronous>, transform_indices = @transform_4, window_bounds = array<i64: 8, 1>}, {transform_indices = @transform_5, window_bounds = array<i64: 8, 256>}]} {
    %c0 = arith.constant 0 : index
    %c0_0 = arith.constant 0 : index
    %0 = vector.load %arg2[%c0, %c0_0] : memref<64x3xf32, #tpu.memory_space<vmem>>, vector<64x3xf32>
    %c0_1 = arith.constant 0 : index
    %c0_2 = arith.constant 0 : index
    %1 = vector.load %arg1[%c0_1, %c0_2] : memref<3x256xf32, #tpu.memory_space<vmem>>, vector<3x256xf32>
    %cst = arith.constant dense<0.000000e+00> : vector<64x256xf32>
    %2 = tpu.matmul %0, %1, %cst {dimension_numbers = #tpu.dot_dimension_numbers<[1], [0], [0], [1], [0, 0, 1, 1], [], []>} : vector<64x3xf32>, vector<3x256xf32>, vector<64x256xf32> -> vector<64x256xf32>
    %c0_3 = arith.constant 0 : index
    %c0_4 = arith.constant 0 : index
    %3 = vector.load %arg3[%c0_3, %c0_4] : memref<64x1xf32, #tpu.memory_space<vmem>>, vector<64x1xf32>
    %4 = vector.broadcast %3 : vector<64x1xf32> to vector<64x256xf32>
    %5 = arith.addf %2, %4 : vector<64x256xf32>
    %cst_5 = arith.constant 0.000000e+00 : f32
    %6 = vector.broadcast %cst_5 : f32 to vector<64x256xf32>
    %7 = arith.maximumf %5, %6 : vector<64x256xf32>
    %c0_6 = arith.constant 0 : index
    %c0_7 = arith.constant 0 : index
    %8 = vector.load %arg4[%c0_6, %c0_7] : memref<8x64xf32, #tpu.memory_space<vmem>>, vector<8x64xf32>
    %cst_8 = arith.constant dense<0.000000e+00> : vector<8x256xf32>
    %9 = tpu.matmul %8, %7, %cst_8 {dimension_numbers = #tpu.dot_dimension_numbers<[1], [0], [0], [1], [0, 0, 1, 1], [], []>} : vector<8x64xf32>, vector<64x256xf32>, vector<8x256xf32> -> vector<8x256xf32>
    %c0_9 = arith.constant 0 : index
    %c0_10 = arith.constant 0 : index
    %10 = vector.load %arg5[%c0_9, %c0_10] : memref<8x1xf32, #tpu.memory_space<vmem>>, vector<8x1xf32>
    %11 = vector.broadcast %10 : vector<8x1xf32> to vector<8x256xf32>
    %12 = arith.addf %9, %11 : vector<8x256xf32>
    %c0_11 = arith.constant 0 : index
    %c0_12 = arith.constant 0 : index
    %13 = vector.load %arg6[%c0_11, %c0_12] : memref<8x256xf32, #tpu.memory_space<vmem>>, vector<8x256xf32>
    tpu.vector_store %arg6[%c0_11, %c0_12], %12 {strides = array<i32>} : memref<8x256xf32, #tpu.memory_space<vmem>>, vector<8x256xf32>,
    return
  }
  func.func @transform_0(%arg0: i32) -> (i32, i32) {
    %c0_i32 = arith.constant 0 : i32
    %c0_i32_0 = arith.constant 0 : i32
    return %c0_i32, %arg0 : i32, i32
  }
  func.func @transform_1(%arg0: i32) -> (i32, i32) {
    %c0_i32 = arith.constant 0 : i32
    %c0_i32_0 = arith.constant 0 : i32
    %c0_i32_1 = arith.constant 0 : i32
    return %c0_i32, %c0_i32_0 : i32, i32
  }
  func.func @transform_2(%arg0: i32) -> (i32, i32) {
    %c0_i32 = arith.constant 0 : i32
    %c0_i32_0 = arith.constant 0 : i32
    %c0_i32_1 = arith.constant 0 : i32
    return %c0_i32, %c0_i32_0 : i32, i32
  }
  func.func @transform_3(%arg0: i32) -> (i32, i32) {
    %c0_i32 = arith.constant 0 : i32
    %c0_i32_0 = arith.constant 0 : i32
    %c0_i32_1 = arith.constant 0 : i32
    return %c0_i32, %c0_i32_0 : i32, i32
  }
  func.func @transform_4(%arg0: i32) -> (i32, i32) {
    %c0_i32 = arith.constant 0 : i32
    %c0_i32_0 = arith.constant 0 : i32
    %c0_i32_1 = arith.constant 0 : i32
    return %c0_i32, %c0_i32_0 : i32, i32
  }
  func.func @transform_5(%arg0: i32) -> (i32, i32) {
    %c0_i32 = arith.constant 0 : i32
    %c0_i32_0 = arith.constant 0 : i32
    return %c0_i32, %arg0 : i32, i32
  }
}

</mosaic_0001>

<llo_original>
// kernel: crime_model_forward_t.1
$region0: #{crime_model_forward_t.1}
  #allocation0 [shape = 'u32[]', space=smem, size = 0x4, offset = 0x4, fixed_abs, tag = 'smem constant byte address 0x4 - core index']
  #allocation1 [shape = 'u32[144,128]{1,0:T(1,128)}', space=vmem, size = 0x12000, scoped, tag = 'internal scratch']
  %s0 = inlined_call_operand.vmem [shape: f32[3,512], index: 0, kind: input, shape index: {}]
  %s1 = inlined_call_operand.vmem [shape: f32[64,3], index: 1, kind: input, shape index: {}]
  %s2 = inlined_call_operand.vmem [shape: f32[64,1], index: 2, kind: input, shape index: {}]
  %s3 = inlined_call_operand.vmem [shape: f32[8,64], index: 3, kind: input, shape index: {}]
  %s4 = inlined_call_operand.vmem [shape: f32[8,1], index: 4, kind: input, shape index: {}]
  %s5 = inlined_call_operand.vmem [shape: f32[8,512], index: 5, kind: output, shape index: {}]
  %s6 = sld [smem:[#allocation0]]
  $region53: #{crime_model_forward_t.1} parent=0
    _
  %s8 = ssub.s32 1, %s6
  %s9 = scalar_select 0, %s8, %s6
  loop: start=0, step=1, limit=4
  $region2: #{crime_model_forward_t.1} parent=0 // loop_pre_header
    _
  $region3: #{crime_model_forward_t.1} parent=0 // loop_header
    %s11 = sphi 0, %s15
    %p12 = scmp.ge.s32.totalorder %s11, 4
    %s21 = sphi 0, %s23
    %s24 = sphi 0, %s21
    %s25 = sphi 0, %s24
    %s41 = sphi 0, %s25
    %s45 = sphi 0, %s45
    %s47 = sphi 0, %s45
    %s48 = sphi 0, %s47
    %s62 = sphi 0, %s48
    %s66 = sphi 0, %s66
    %s68 = sphi 0, %s66
    %s69 = sphi 0, %s68
    %s83 = sphi 0, %s69
    %s87 = sphi 0, %s87
    %s89 = sphi 0, %s87
    %s90 = sphi 0, %s89
    %s104 = sphi 0, %s90
    %s108 = sphi 0, %s108
    %s110 = sphi 0, %s108
    %s111 = sphi 0, %s110
    %s125 = sphi 0, %s111
    %s131 = sphi 0, %s133
    %s134 = sphi 0, %s131
    %s135 = sphi 0, %s134
    %s151 = sphi 0, %s135
  $region4: #{crime_model_forward_t.1} parent=0 // loop_header_branch
    %14 = sbr.rel (%p12) target = $region8
  $region5: #{crime_model_forward_t.1} parent=0 // loop_body
    %s16 = ssub.s32 %s11, 1
    %s17 = ssub.s32 %s11, 2
    %s18 = sadd.s32 %s11, 1
    %s19 = ssub.s32 %s11, %s18
    %p20 = scmp.eq.s32.totalorder %s19, 0
    %s22 = sadd.s32 %s21, 1
    %s23 = scalar_select %p20, %s21, %s22
    %p26 = pneg %p20
    %p27 = scmp.eq.s32.totalorder %s11, 1
    %p28 = por %p26, %p27
    %p29 = scmp.ne.s32.totalorder %s21, %s24
    %p30 = scmp.eq.s32.totalorder %s11, 0
    %p31 = por %p29, %p30
    %p32 = scmp.ne.s32.totalorder %s21, %s24
    %p33 = scmp.eq.s32.totalorder %s16, 1
    %p34 = por %p32, %p33
    %p35 = scmp.ne.s32.totalorder %s24, %s25
    %p36 = scmp.eq.s32.totalorder %s16, 0
    %p37 = por %p35, %p36
    %p38 = scmp.ne.s32.totalorder %s24, %s25
    %p39 = scmp.eq.s32.totalorder %s17, 1
    %p40 = por %p38, %p39
    %p42 = scmp.ne.s32.totalorder %s25, %s41
    %p43 = scmp.eq.s32.totalorder %s17, 0
    %p44 = por %p42, %p43
    %s46 = sadd.s32 %s45, 1
    %p49 = scmp.eq.s32.totalorder %s11, 1
    %p50 = scmp.ne.s32.totalorder %s45, %s47
    %p51 = scmp.eq.s32.totalorder %s11, 0
    %p52 = por %p50, %p51
    %p53 = scmp.ne.s32.totalorder %s45, %s47
    %p54 = scmp.eq.s32.totalorder %s16, 1
    %p55 = por %p53, %p54
    %p56 = scmp.ne.s32.totalorder %s47, %s48
    %p57 = scmp.eq.s32.totalorder %s16, 0
    %p58 = por %p56, %p57
    %p59 = scmp.ne.s32.totalorder %s47, %s48
    %p60 = scmp.eq.s32.totalorder %s17, 1
    %p61 = por %p59, %p60
    %p63 = scmp.ne.s32.totalorder %s48, %s62
    %p64 = scmp.eq.s32.totalorder %s17, 0
    %p65 = por %p63, %p64
    %s67 = sadd.s32 %s66, 1
    %p70 = scmp.eq.s32.totalorder %s11, 1
    %p71 = scmp.ne.s32.totalorder %s66, %s68
    %p72 = scmp.eq.s32.totalorder %s11, 0
    %p73 = por %p71, %p72
    %p74 = scmp.ne.s32.totalorder %s66, %s68
    %p75 = scmp.eq.s32.totalorder %s16, 1
    %p76 = por %p74, %p75
    %p77 = scmp.ne.s32.totalorder %s68, %s69
    %p78 = scmp.eq.s32.totalorder %s16, 0
    %p79 = por %p77, %p78
    %p80 = scmp.ne.s32.totalorder %s68, %s69
    %p81 = scmp.eq.s32.totalorder %s17, 1
    %p82 = por %p80, %p81
    %p84 = scmp.ne.s32.totalorder %s69, %s83
    %p85 = scmp.eq.s32.totalorder %s17, 0
    %p86 = por %p84, %p85
    %s88 = sadd.s32 %s87, 1
    %p91 = scmp.eq.s32.totalorder %s11, 1
    %p92 = scmp.ne.s32.totalorder %s87, %s89
    %p93 = scmp.eq.s32.totalorder %s11, 0
    %p94 = por %p92, %p93
    %p95 = scmp.ne.s32.totalorder %s87, %s89
    %p96 = scmp.eq.s32.totalorder %s16, 1
    %p97 = por %p95, %p96
    %p98 = scmp.ne.s32.totalorder %s89, %s90
    %p99 = scmp.eq.s32.totalorder %s16, 0
    %p100 = por %p98, %p99
    %p101 = scmp.ne.s32.totalorder %s89, %s90
    %p102 = scmp.eq.s32.totalorder %s17, 1
    %p103 = por %p101, %p102
    %p105 = scmp.ne.s32.totalorder %s90, %s104
    %p106 = scmp.eq.s32.totalorder %s17, 0
    %p107 = por %p105, %p106
    %s109 = sadd.s32 %s108, 1
    %p112 = scmp.eq.s32.totalorder %s11, 1
    %p113 = scmp.ne.s32.totalorder %s108, %s110
    %p114 = scmp.eq.s32.totalorder %s11, 0
    %p115 = por %p113, %p114
    %p116 = scmp.ne.s32.totalorder %s108, %s110
    %p117 = scmp.eq.s32.totalorder %s16, 1
    %p118 = por %p116, %p117
    %p119 = scmp.ne.s32.totalorder %s110, %s111
    %p120 = scmp.eq.s32.totalorder %s16, 0
    %p121 = por %p119, %p120
    %p122 = scmp.ne.s32.totalorder %s110, %s111
    %p123 = scmp.eq.s32.totalorder %s17, 1
    %p124 = por %p122, %p123
    %p126 = scmp.ne.s32.totalorder %s111, %s125
    %p127 = scmp.eq.s32.totalorder %s17, 0
    %p128 = por %p126, %p127
    %s129 = ssub.s32 %s11, %s18
    %p130 = scmp.eq.s32.totalorder %s129, 0
    %s132 = sadd.s32 %s131, 1
    %s133 = scalar_select %p130, %s131, %s132
    %p136 = pneg %p130
    %p137 = scmp.eq.s32.totalorder %s11, 1
    %p138 = por %p136, %p137
    %p139 = scmp.ne.s32.totalorder %s131, %s134
    %p140 = scmp.eq.s32.totalorder %s11, 0
    %p141 = por %p139, %p140
    %p142 = scmp.ne.s32.totalorder %s131, %s134
    %p143 = scmp.eq.s32.totalorder %s16, 1
    %p144 = por %p142, %p143
    %p145 = scmp.ne.s32.totalorder %s134, %s135
    %p146 = scmp.eq.s32.totalorder %s16, 0
    %p147 = por %p145, %p146
    %p148 = scmp.ne.s32.totalorder %s134, %s135
    %p149 = scmp.eq.s32.totalorder %s17, 1
    %p150 = por %p148, %p149
    %p152 = scmp.ne.s32.totalorder %s135, %s151
    %p153 = scmp.eq.s32.totalorder %s17, 0
    %p154 = por %p152, %p153
    %p155 = scmp.le.s32.totalorder 1, %s11
    %p156 = scmp.lt.s32.totalorder %s11, 3
    %p157 = pnand %p155, %p156
    %p158 = pneg %p157
    // Predicated region
    $region9: #{crime_model_forward_t.1} parent=5 // pred_check
      _
    $region10: #{crime_model_forward_t.1} parent=5 // pred_check_branch
      %160 = sbr.rel (%p157) target = $region12
    $region11: #{crime_model_forward_t.1} parent=5 // pred_region
      %s161 = ssub.s32 %s11, 1
      // Predicated region
      $region13: #{crime_model_forward_t.1} parent=11 // pred_check
        %p162 = pneg %p58
      $region14: #{crime_model_forward_t.1} parent=11 // pred_check_branch
        %164 = sbr.rel (%p162) target = $region16
      $region15: #{crime_model_forward_t.1} parent=11 // pred_region
        _
      $region16: #{crime_model_forward_t.1} parent=11 // pred_fallthru
        _
      // Predicated region
      $region17: #{crime_model_forward_t.1} parent=11 // pred_check
        %p165 = pneg %p79
      $region18: #{crime_model_forward_t.1} parent=11 // pred_check_branch
        %167 = sbr.rel (%p165) target = $region20
      $region19: #{crime_model_forward_t.1} parent=11 // pred_region
        _
      $region20: #{crime_model_forward_t.1} parent=11 // pred_fallthru
        _
      // Predicated region
      $region21: #{crime_model_forward_t.1} parent=11 // pred_check
        %p168 = pneg %p100
      $region22: #{crime_model_forward_t.1} parent=11 // pred_check_branch
        %170 = sbr.rel (%p168) target = $region24
      $region23: #{crime_model_forward_t.1} parent=11 // pred_region
        _
      $region24: #{crime_model_forward_t.1} parent=11 // pred_fallthru
        _
      // Predicated region
      $region25: #{crime_model_forward_t.1} parent=11 // pred_check
        %p171 = pneg %p121
      $region26: #{crime_model_forward_t.1} parent=11 // pred_check_branch
        %173 = sbr.rel (%p171) target = $region28
      $region27: #{crime_model_forward_t.1} parent=11 // pred_region
        _
      $region28: #{crime_model_forward_t.1} parent=11 // pred_fallthru
        _
    $region12: #{crime_model_forward_t.1} parent=5 // pred_fallthru
      _
    %p174 = scmp.lt.s32.totalorder %s11, 2
    // Predicated region
    $region29: #{crime_model_forward_t.1} parent=5 // pred_check
      %p175 = pneg %p174
    $region30: #{crime_model_forward_t.1} parent=5 // pred_check_branch
      %177 = sbr.rel (%p175) target = $region32
    $region31: #{crime_model_forward_t.1} parent=5 // pred_region
      // Predicated region
      $region33: #{crime_model_forward_t.1} parent=31 // pred_check
        %p178 = pneg %p31
      $region34: #{crime_model_forward_t.1} parent=31 // pred_check_branch
        %180 = sbr.rel (%p178) target = $region36
      $region35: #{crime_model_forward_t.1} parent=31 // pred_region
        %s181 = smul.u32 2, %s11
        %p182 = scmp.lt.s32.totalorder %s181, 3
        %s183 = scalar_select %p182, %s181, 3
        %s184 = smul.addr %s183, 4
        %s185 = scalar_lea.vmem %s0, %s184
        %s186 = smul.u32 2, %s11
      $region36: #{crime_model_forward_t.1} parent=31 // pred_fallthru
        _
    $region32: #{crime_model_forward_t.1} parent=5 // pred_fallthru
      _
    %p187 = scmp.le.s32.totalorder 1, %s11
    %p188 = scmp.lt.s32.totalorder %s11, 3
    %p189 = pnand %p187, %p188
    %p190 = pneg %p189
    // Predicated region
    $region37: #{crime_model_forward_t.1} parent=5 // pred_check
      _
    $region38: #{crime_model_forward_t.1} parent=5 // pred_check_branch
      %192 = sbr.rel (%p189) target = $region40
    $region39: #{crime_model_forward_t.1} parent=5 // pred_region
      %s193 = ssub.s32 %s11, 1
      %s194 = smul.u32 2, %s16
      %p195 = scmp.lt.s32.totalorder %s194, 3
      %s196 = scalar_select %p195, %s194, 3
      %s197 = smul.addr %s196, 4
      %s198 = scalar_lea.vmem %s0, %s197
      %p199 = pneg %p37
      %p200 = pneg %p34
      %p201 = pneg %p58
      %p202 = pneg %p55
      %p203 = pneg %p79
      %p204 = pneg %p76
      %p205 = pneg %p100
      %p206 = pneg %p97
      %p207 = pneg %p121
      %p208 = pneg %p118
      %p209 = pneg %p147
      %p210 = pneg %p144
      %s211 = smul.u32 2, %s16
      %p212 = scmp.lt.s32.totalorder %s211, 3
      %s213 = scalar_select %p212, %s211, 3
      %s214 = smul.addr %s213, 8
      %s215 = scalar_lea.vmem %s5, %s214
      %s216 = smul.u32 2, %s16
      %p217 = scmp.lt.s32.totalorder %s216, 3
      %s218 = scalar_select %p217, %s216, 3
      %s219 = smul.addr %s218, 4
      %s220 = scalar_lea.vmem %s0, %s219
      %s221 = smul.u32 2, %s16
      %s222 = smul.u32 2, %s16
      %p223 = scmp.lt.s32.totalorder %s222, 3
      %s224 = scalar_select %p223, %s222, 3
      %s225 = smul.addr %s224, 8
      %s226 = scalar_lea.vmem %s5, %s225
      %s227 = smul.u32 2, %s16
      %v228 = vld [vmem:[%s1] sm:$0xff]
      %v229 = vld [vmem:[%s1 + $0x8] sm:$0xff]
      %v230 = vld [vmem:[%s1 + $0x10] sm:$0xff]
      %v231 = vld [vmem:[%s1 + $0x18] sm:$0xff]
      %v232 = vld [vmem:[%s1 + $0x20] sm:$0xff]
      %v233 = vld [vmem:[%s1 + $0x28] sm:$0xff]
      %v234 = vld [vmem:[%s1 + $0x30] sm:$0xff]
      %v235 = vld [vmem:[%s1 + $0x38] sm:$0xff]
      %v236 = vld [vmem:[%s220] sm:$0x77]
      %v237 = vld [vmem:[%s2] sm:$0xff]
      %v238 = vld [vmem:[%s2 + $0x8] sm:$0xff]
      %v239 = vld [vmem:[%s2 + $0x10] sm:$0xff]
      %v240 = vld [vmem:[%s2 + $0x18] sm:$0xff]
      %v241 = vld [vmem:[%s2 + $0x20] sm:$0xff]
      %v242 = vld [vmem:[%s2 + $0x28] sm:$0xff]
      %v243 = vld [vmem:[%s2 + $0x30] sm:$0xff]
      %v244 = vld [vmem:[%s2 + $0x38] sm:$0xff]
      %246 = vset.pattern.permute.xlu0 0
      %247 = vperm.xlu0 %246, %v237
      %v248 = vpop.permute.xlu0 %247
      %251 = vset.pattern.permute.xlu0 0
      %252 = vperm.xlu0 %251, %v238
      %v253 = vpop.permute.xlu0 %252
      %256 = vset.pattern.permute.xlu0 0
      %257 = vperm.xlu0 %256, %v239
      %v258 = vpop.permute.xlu0 %257
      %261 = vset.pattern.permute.xlu0 0
      %262 = vperm.xlu0 %261, %v240
      %v263 = vpop.permute.xlu0 %262
      %266 = vset.pattern.permute.xlu0 0
      %267 = vperm.xlu0 %266, %v241
      %v268 = vpop.permute.xlu0 %267
      %271 = vset.pattern.permute.xlu0 0
      %272 = vperm.xlu0 %271, %v242
      %v273 = vpop.permute.xlu0 %272
      %276 = vset.pattern.permute.xlu0 0
      %277 = vperm.xlu0 %276, %v243
      %v278 = vpop.permute.xlu0 %277
      %281 = vset.pattern.permute.xlu0 0
      %282 = vperm.xlu0 %281, %v244
      %v283 = vpop.permute.xlu0 %282
      %v286 = vcombine.high %v236, %v236
      %vm287 = vcmask 23552
      %v289 = vsel %vm287, %v228, 0
      %v292 = vsel %vm287, %v229, 0
      %v295 = vsel %vm287, %v230, 0
      %v298 = vsel %vm287, %v231, 0
      %v301 = vsel %vm287, %v232, 0
      %v304 = vsel %vm287, %v233, 0
      %v307 = vsel %vm287, %v234, 0
      %v310 = vsel %vm287, %v235, 0
      %vm312 = vcmask 1042432
      %v313 = vsel %vm312, %v236, 0
      %v315 = vsel %vm312, %v286, 0
      %317 = vmatprep.subr.mxu0 %v315
      %318 = vmatpush1.msra.mxu0 %v313
      %319 = vmatprep.subr.mxu0 0.0
      %320 = vmatpush1.msra.mxu0 0.0
      %321 = vmatprep.subr.mxu0 0.0
      %322 = vmatpush1.msra.mxu0 0.0
      %323 = vmatprep.subr.mxu0 0.0
      %324 = vmatpush1.msra.mxu0 0.0
      %325 = vmatprep.subr.mxu0 0.0
      %326 = vmatpush1.msra.mxu0 0.0
      %327 = vmatprep.subr.mxu0 0.0
      %328 = vmatpush1.msra.mxu0 0.0
      %329 = vmatprep.subr.mxu0 0.0
      %330 = vmatpush1.msra.mxu0 0.0
      %331 = vmatprep.subr.mxu0 0.0
      %332 = vmatpush1.msra.mxu0 0.0
      %333 = vmatprep.subr.mxu0 0.0
      %334 = vmatpush1.msra.mxu0 0.0
      %335 = vmatprep.subr.mxu0 0.0
      %336 = vmatpush1.msra.mxu0 0.0
      %337 = vmatprep.subr.mxu0 0.0
      %338 = vmatpush1.msra.mxu0 0.0
      %339 = vmatprep.subr.mxu0 0.0
      %340 = vmatpush1.msra.mxu0 0.0
      %341 = vmatprep.subr.mxu0 0.0
      %342 = vmatpush1.msra.mxu0 0.0
      %343 = vmatprep.subr.mxu0 0.0
      %344 = vmatpush1.msra.mxu0 0.0
      %345 = vmatprep.subr.mxu0 0.0
      %346 = vmatpush1.msra.mxu0 0.0
      %347 = vmatprep.subr.mxu0 0.0
      %348 = vmatpush1.msra.mxu0 0.0
      %349 = vmatprep.subr.mxu0 0.0
      %350 = vmatpush1.msra.mxu0 0.0
      %351 = vmatprep.subr.mxu0 0.0
      %352 = vmatpush1.msra.mxu0 0.0
      %353 = vmatprep.subr.mxu0 0.0
      %354 = vmatpush1.msra.mxu0 0.0
      %355 = vmatprep.subr.mxu0 0.0
      %356 = vmatpush1.msra.mxu0 0.0
      %357 = vmatprep.subr.mxu0 0.0
      %358 = vmatpush1.msra.mxu0 0.0
      %359 = vmatprep.subr.mxu0 0.0
      %360 = vmatpush1.msra.mxu0 0.0
      %361 = vmatprep.subr.mxu0 0.0
      %362 = vmatpush1.msra.mxu0 0.0
      %363 = vmatprep.subr.mxu0 0.0
      %364 = vmatpush1.msra.mxu0 0.0
      %365 = vmatprep.subr.mxu0 0.0
      %366 = vmatpush1.msra.mxu0 0.0
      %367 = vmatprep.subr.mxu0 0.0
      %368 = vmatpush1.msra.mxu0 0.0
      %369 = vmatprep.subr.mxu0 0.0
      %370 = vmatpush1.msra.mxu0 0.0
      %371 = vmatprep.subr.mxu0 0.0
      %372 = vmatpush1.msra.mxu0 0.0
      %373 = vmatprep.subr.mxu0 0.0
      %374 = vmatpush1.msra.mxu0 0.0
      %375 = vmatprep.subr.mxu0 0.0
      %376 = vmatpush1.msra.mxu0 0.0
      %377 = vmatprep.subr.mxu0 0.0
      %378 = vmatpush1.msra.mxu0 0.0
      %379 = vmatprep.subr.mxu0 0.0
      %380 = vmatpush1.msra.mxu0 0.0
      %381 = vmatprep.mubr.f32.mxu0 0.0
      %382 = vmatmul.mubr.f32.gmra.mrb[0].mxu0 %v289
      %v383 = vpop.f32.mrb[0].mxu0
      %v384 = vadd.f32 %v248, %v383
      %v385 = vpop.f32.mrb[0].mxu0
      %v386 = vadd.f32 %v248, %v385
      %387 = vmatprep.mubr.f32.mxu0 0.0
      %388 = vmatmul.mubr.f32.gmra.mrb[0].mxu0 %v292
      %v389 = vpop.f32.mrb[0].mxu0
      %v390 = vadd.f32 %v253, %v389
      %v391 = vpop.f32.mrb[0].mxu0
      %v392 = vadd.f32 %v253, %v391
      %393 = vmatprep.mubr.f32.mxu0 0.0
      %394 = vmatmul.mubr.f32.gmra.mrb[0].mxu0 %v295
      %v395 = vpop.f32.mrb[0].mxu0
      %v396 = vadd.f32 %v258, %v395
      %v397 = vpop.f32.mrb[0].mxu0
      %v398 = vadd.f32 %v258, %v397
      %399 = vmatprep.mubr.f32.mxu0 0.0
      %400 = vmatmul.mubr.f32.gmra.mrb[0].mxu0 %v298
      %v401 = vpop.f32.mrb[0].mxu0
      %v402 = vadd.f32 %v263, %v401
      %v403 = vpop.f32.mrb[0].mxu0
      %v404 = vadd.f32 %v263, %v403
      %405 = vmatprep.mubr.f32.mxu0 0.0
      %406 = vmatmul.mubr.f32.gmra.mrb[0].mxu0 %v301
      %v407 = vpop.f32.mrb[0].mxu0
      %v408 = vadd.f32 %v268, %v407
      %v409 = vpop.f32.mrb[0].mxu0
      %v410 = vadd.f32 %v268, %v409
      %411 = vmatprep.mubr.f32.mxu0 0.0
      %412 = vmatmul.mubr.f32.gmra.mrb[0].mxu0 %v304
      %v413 = vpop.f32.mrb[0].mxu0
      %v414 = vadd.f32 %v273, %v413
      %v415 = vpop.f32.mrb[0].mxu0
      %v416 = vadd.f32 %v273, %v415
      %417 = vmatprep.mubr.f32.mxu0 0.0
      %418 = vmatmul.mubr.f32.gmra.mrb[0].mxu0 %v307
      %v419 = vpop.f32.mrb[0].mxu0
      %v420 = vadd.f32 %v278, %v419
      %v421 = vpop.f32.mrb[0].mxu0
      %v422 = vadd.f32 %v278, %v421
      %423 = vmatprep.mubr.f32.mxu0 0.0
      %424 = vmatmul.mubr.f32.gmra.mrb[0].mxu0 %v310
      %v425 = vpop.f32.mrb[0].mxu0
      %v426 = vadd.f32 %v283, %v425
      %v427 = vpop.f32.mrb[0].mxu0
      %v428 = vadd.f32 %v283, %v427
      %429 = vdwg.mxu0
      %v430 = vmax.f32 %v384, 0.0
      %v431 = vmax.f32 %v386, 0.0
      %v432 = vmax.f32 %v390, 0.0
      %v433 = vmax.f32 %v392, 0.0
      %v434 = vmax.f32 %v396, 0.0
      %v435 = vmax.f32 %v398, 0.0
      %v436 = vmax.f32 %v402, 0.0
      %v437 = vmax.f32 %v404, 0.0
      %v438 = vmax.f32 %v408, 0.0
      %v439 = vmax.f32 %v410, 0.0
      %v440 = vmax.f32 %v414, 0.0
      %v441 = vmax.f32 %v416, 0.0
      %v442 = vmax.f32 %v420, 0.0
      %v443 = vmax.f32 %v422, 0.0
      %v444 = vmax.f32 %v426, 0.0
      %v445 = vmax.f32 %v428, 0.0
      %v446 = vld [vmem:[%s3] sm:$0xff]
      %v447 = vld [vmem:[%s4] sm:$0xff]
      %449 = vset.pattern.permute.xlu0 0
      %450 = vperm.xlu0 %449, %v447
      %v451 = vpop.permute.xlu0 %450
      %vm453 = vcmask 523264
      %v455 = vsel %vm453, %v446, 0
      %457 = vmatprep.subr.mxu0 %v431
      %458 = vmatpush1.msra.mxu0 %v430
      %459 = vmatprep.subr.mxu0 %v433
      %460 = vmatpush1.msra.mxu0 %v432
      %461 = vmatprep.subr.mxu0 %v435
      %462 = vmatpush1.msra.mxu0 %v434
      %463 = vmatprep.subr.mxu0 %v437
      %464 = vmatpush1.msra.mxu0 %v436
      %465 = vmatprep.subr.mxu0 %v439
      %466 = vmatpush1.msra.mxu0 %v438
      %467 = vmatprep.subr.mxu0 %v441
      %468 = vmatpush1.msra.mxu0 %v440
      %469 = vmatprep.subr.mxu0 %v443
      %470 = vmatpush1.msra.mxu0 %v442
      %471 = vmatprep.subr.mxu0 %v445
      %472 = vmatpush1.msra.mxu0 %v444
      %473 = vmatprep.subr.mxu0 0.0
      %474 = vmatpush1.msra.mxu0 0.0
      %475 = vmatprep.subr.mxu0 0.0
      %476 = vmatpush1.msra.mxu0 0.0
      %477 = vmatprep.subr.mxu0 0.0
      %478 = vmatpush1.msra.mxu0 0.0
      %479 = vmatprep.subr.mxu0 0.0
      %480 = vmatpush1.msra.mxu0 0.0
      %481 = vmatprep.subr.mxu0 0.0
      %482 = vmatpush1.msra.mxu0 0.0
      %483 = vmatprep.subr.mxu0 0.0
      %484 = vmatpush1.msra.mxu0 0.0
      %485 = vmatprep.subr.mxu0 0.0
      %486 = vmatpush1.msra.mxu0 0.0
      %487 = vmatprep.subr.mxu0 0.0
      %488 = vmatpush1.msra.mxu0 0.0
      %489 = vmatprep.subr.mxu0 0.0
      %490 = vmatpush1.msra.mxu0 0.0
      %491 = vmatprep.subr.mxu0 0.0
      %492 = vmatpush1.msra.mxu0 0.0
      %493 = vmatprep.subr.mxu0 0.0
      %494 = vmatpush1.msra.mxu0 0.0
      %495 = vmatprep.subr.mxu0 0.0
      %496 = vmatpush1.msra.mxu0 0.0
      %497 = vmatprep.subr.mxu0 0.0
      %498 = vmatpush1.msra.mxu0 0.0
      %499 = vmatprep.subr.mxu0 0.0
      %500 = vmatpush1.msra.mxu0 0.0
      %501 = vmatprep.subr.mxu0 0.0
      %502 = vmatpush1.msra.mxu0 0.0
      %503 = vmatprep.subr.mxu0 0.0
      %504 = vmatpush1.msra.mxu0 0.0
      %505 = vmatprep.subr.mxu0 0.0
      %506 = vmatpush1.msra.mxu0 0.0
      %507 = vmatprep.subr.mxu0 0.0
      %508 = vmatpush1.msra.mxu0 0.0
      %509 = vmatprep.subr.mxu0 0.0
      %510 = vmatpush1.msra.mxu0 0.0
      %511 = vmatprep.subr.mxu0 0.0
      %512 = vmatpush1.msra.mxu0 0.0
      %513 = vmatprep.subr.mxu0 0.0
      %514 = vmatpush1.msra.mxu0 0.0
      %515 = vmatprep.subr.mxu0 0.0
      %516 = vmatpush1.msra.mxu0 0.0
      %517 = vmatprep.subr.mxu0 0.0
      %518 = vmatpush1.msra.mxu0 0.0
      %519 = vmatprep.subr.mxu0 0.0
      %520 = vmatpush1.msra.mxu0 0.0
      %521 = vmatprep.mubr.f32.mxu0 0.0
      %522 = vmatmul.mubr.f32.gmra.mrb[0].mxu0 %v455
      %v523 = vpop.f32.mrb[0].mxu0
      %v524 = vadd.f32 %v451, %v523
      %v525 = vpop.f32.mrb[0].mxu0
      %v526 = vadd.f32 %v451, %v525
      %527 = vdwg.mxu0
      %528 = vst [vmem:[%s226] sm:$0xff] %v524
      %529 = vst [vmem:[%s226 + $0x8] sm:$0xff] %v526
      %s530 = smul.u32 2, %s16
      %p531 = scmp.lt.s32.totalorder %s530, 3
      %s532 = scalar_select %p531, %s530, 3
      %s533 = smul.addr %s532, 8
      %s534 = scalar_lea.vmem %s5, %s533
      // Predicated region
      $region41: #{crime_model_forward_t.1} parent=39 // pred_check
        %p535 = pneg %p144
      $region42: #{crime_model_forward_t.1} parent=39 // pred_check_branch
        %537 = sbr.rel (%p535) target = $region44
      $region43: #{crime_model_forward_t.1} parent=39 // pred_region
        %s538 = smul.u32 2, %s16
      $region44: #{crime_model_forward_t.1} parent=39 // pred_fallthru
        _
    $region40: #{crime_model_forward_t.1} parent=5 // pred_fallthru
      _
    %p539 = scmp.le.s32.totalorder 2, %s11
    // Predicated region
    $region45: #{crime_model_forward_t.1} parent=5 // pred_check
      %p540 = pneg %p539
    $region46: #{crime_model_forward_t.1} parent=5 // pred_check_branch
      %542 = sbr.rel (%p540) target = $region48
    $region47: #{crime_model_forward_t.1} parent=5 // pred_region
      %s543 = ssub.s32 %s11, 2
      // Predicated region
      $region49: #{crime_model_forward_t.1} parent=47 // pred_check
        %p544 = pneg %p150
      $region50: #{crime_model_forward_t.1} parent=47 // pred_check_branch
        %546 = sbr.rel (%p544) target = $region52
      $region51: #{crime_model_forward_t.1} parent=47 // pred_region
        %s547 = smul.u32 2, %s17
        %p548 = scmp.lt.s32.totalorder %s547, 3
        %s549 = scalar_select %p548, %s547, 3
        %s550 = smul.addr %s549, 8
        %s551 = scalar_lea.vmem %s5, %s550
      $region52: #{crime_model_forward_t.1} parent=47 // pred_fallthru
        _
    $region48: #{crime_model_forward_t.1} parent=5 // pred_fallthru
      _
  $region6: #{crime_model_forward_t.1} parent=0 // loop_footer
    %s15 = sadd.s32 1, %s11
  $region7: #{crime_model_forward_t.1} parent=0 // loop_footer_branch
    %10 = sbr.rel target = $region3
  $region8: #{crime_model_forward_t.1} parent=0 // loop_exit
    _

</llo_original>
